<compile_context>
chip_gen: v5e
topology: v5e:2x2
jax: 0.10.0
libtpu: 0.0.40
codegen_flags: <defaults>
</compile_context>

<pallas_src>
import functools

import jax
import jax.numpy as jnp
from jax.experimental import pallas as pl
from jax.experimental.pallas import tpu as pltpu


def pg_forward_kernel(state_ref, w1_ref, b1_ref, w23_ref, b23_ref,
                      probs_ref, v_ref, *, num_actions):
    # Layer 1: relu(state @ W1 + b1). Bias added in-kernel (free VPU add).
    h = jnp.dot(state_ref[...].astype(jnp.float32), w1_ref[...],
                preferred_element_type=jnp.float32)
    h = jnp.maximum(h + b1_ref[...], 0.0)                          # [TB, H]

    # Fused policy + value head: cols 0..A-1 -> W2 (+b2), col A -> W3 (+b3).
    y = jnp.dot(h, w23_ref[...], preferred_element_type=jnp.float32)
    y = y + b23_ref[...]                                           # [TB, A+1]

    # Value head: no activation.
    v_ref[...] = y[:, num_actions:num_actions + 1].astype(v_ref.dtype)

    # Policy head: relu then softmax (matches the reference module).
    logits = jnp.maximum(y[:, :num_actions], 0.0)                  # [TB, A]
    m = jnp.max(logits, axis=-1, keepdims=True)
    e = jnp.exp(logits - m)
    denom = jnp.sum(e, axis=-1, keepdims=True)
    probs_ref[...] = (e / denom).astype(probs_ref.dtype)           # exact divide


def pack_pg_params(w1, b1, w2, b2, w3, b3):
    """One-time packing (hoisted out of the per-call path).

    Weights are in [in, out] layout; biases are [1, out].
    Returns (w1, b1, w23, b23) with w23 = [W2 | W3] (shape [H, A+1]).
    """
    f32 = jnp.float32
    w23 = jnp.concatenate([w2, w3], axis=1).astype(f32)            # [H, A+1]
    b23 = jnp.concatenate([b2, b3], axis=1).astype(f32)            # [1, A+1]
    return w1.astype(f32), b1.astype(f32), w23, b23


def pg_agent_forward(state, packed_params, *, num_actions, batch_tile=4096):
    """state: [B, S] (any float dtype); packed_params from pack_pg_params."""
    w1, b1, w23, b23 = packed_params
    B, S = state.shape
    H = w1.shape[1]
    A = num_actions
    assert w23.shape == (H, A + 1) and b23.shape == (1, A + 1)

    # Batch tiling: partial last block is safe (rows independent, OOB writes
    # discarded); large batches get >=2 grid steps -> megacore sharding on v7x.
    tb = min(B, batch_tile)
    grid = (pl.cdiv(B, tb),)

    # Scoped-VMEM headroom (v5e default scoped limit is only 16 MiB of 128;
    # v7x physical VMEM is 64 MiB) -- stay well inside both.
    per_step_bytes = 4 * tb * (S + A + 2)                # state tile + both outputs
    weight_bytes = 4 * (S * H + H + H * (A + 1) + (A + 1))
    vmem_limit = int(min(64 * 1024 * 1024,
                         max(32 * 1024 * 1024, 4 * per_step_bytes + weight_bytes)))

    probs, v_s = pl.pallas_call(
        functools.partial(pg_forward_kernel, num_actions=A),
        out_shape=(jax.ShapeDtypeStruct((B, A), jnp.float32),
                   jax.ShapeDtypeStruct((B, 1), jnp.float32)),
        grid=grid,
        in_specs=[
            pl.BlockSpec((tb, S), lambda b: (b, 0)),         # state tile
            pl.BlockSpec((S, H), lambda b: (0, 0)),          # W1 (resident)
            pl.BlockSpec((1, H), lambda b: (0, 0)),          # b1
            pl.BlockSpec((H, A + 1), lambda b: (0, 0)),      # [W2 | W3]
            pl.BlockSpec((1, A + 1), lambda b: (0, 0)),      # [b2 | b3]
        ],
        out_specs=(
            pl.BlockSpec((tb, A), lambda b: (b, 0)),         # probs, exact width
            pl.BlockSpec((tb, 1), lambda b: (b, 0)),         # value, exact width
        ),
        compiler_params=pltpu.CompilerParams(
            dimension_semantics=("parallel",),
            vmem_limit_bytes=vmem_limit),
    )(state, w1, b1, w23, b23)
    return probs, v_s


def init_params(key, num_of_states, hl_size, number_of_actions):
    """Deterministic synthetic init (roughly like nn.Linear's uniform init)."""
    k1, k2, k3, k4, k5, k6 = jax.random.split(key, 6)

    def unif(k, shape, fan_in):
        bound = 1.0 / jnp.sqrt(jnp.float32(fan_in))
        return jax.random.uniform(k, shape, jnp.float32, -bound, bound)

    # stored directly in [in, out] layout (transpose of torch's [out, in])
    w1 = unif(k1, (num_of_states, hl_size), num_of_states)
    b1 = unif(k2, (1, hl_size), num_of_states)
    w2 = unif(k3, (hl_size, number_of_actions), hl_size)
    b2 = unif(k4, (1, number_of_actions), hl_size)
    w3 = unif(k5, (hl_size, 1), hl_size)
    b3 = unif(k6, (1, 1), hl_size)
    return w1, b1, w2, b2, w3, b3


if __name__ == "__main__":
    # small shapes consistent with the module's forward
    B = 2                # batch of states
    NUM_STATES = 16      # state-vector size (input dim)
    HL_SIZE = 32         # hidden layer size
    NUM_ACTIONS = 8      # action count (output dim)

    key = jax.random.PRNGKey(0)
    k_params, k_state = jax.random.split(key)
    params = init_params(k_params, NUM_STATES, HL_SIZE, NUM_ACTIONS)
    packed = pack_pg_params(*params)          # hoisted one-time packing

    # one-hot state batch (select_action feeds one-hot vectors); bf16 is exact
    # for one-hot and halves the state DMA stream on bf16-native MXUs.
    state_ids = jnp.array([3, 11], dtype=jnp.int32)
    state = jax.nn.one_hot(state_ids, NUM_STATES, dtype=jnp.bfloat16)

    probs, v_s = pg_agent_forward(state, packed, num_actions=NUM_ACTIONS)
    jax.block_until_ready((probs, v_s))

    # reference check in plain JAX against the ORIGINAL (unpacked) params
    w1, b1, w2, b2, w3, b3 = params
    state_f32 = state.astype(jnp.float32)
    h_ref = jnp.maximum(state_f32 @ w1 + b1, 0.0)
    v_ref = h_ref @ w3 + b3
    logits_ref = jnp.maximum(h_ref @ w2 + b2, 0.0)
    probs_ref = jax.nn.softmax(logits_ref, axis=1)

    assert probs.shape == (B, NUM_ACTIONS) and v_s.shape == (B, 1)
    assert jnp.allclose(probs, probs_ref, atol=1e-5), "probs mismatch"
    assert jnp.allclose(v_s, v_ref, atol=1e-5), "value mismatch"
    assert jnp.allclose(jnp.sum(probs, axis=1), 1.0, atol=1e-5), "softmax not normalized"

    print("KERNEL_OK")
</pallas_src>

<mosaic_0001>
module attributes {stable_mosaic.version = 11 : i64} {
  func.func @pg_forward_kernel(%arg0: i32, %arg1: memref<2x16xbf16, #tpu.memory_space<vmem>>, %arg2: memref<16x32xf32, #tpu.memory_space<vmem>>, %arg3: memref<1x32xf32, #tpu.memory_space<vmem>>, %arg4: memref<32x9xf32, #tpu.memory_space<vmem>>, %arg5: memref<1x9xf32, #tpu.memory_space<vmem>>, %arg6: memref<2x8xf32, #tpu.memory_space<vmem>>, %arg7: memref<2x1xf32, #tpu.memory_space<vmem>>) attributes {dimension_semantics = [#tpu.dimension_semantics<parallel>], iteration_bounds = array<i64: 1>, scalar_prefetch = 0 : i64, scratch_operands = 0 : i64, tpu.core_type = #tpu.core_type<tc>, window_params = [{transform_indices = @transform_0, window_bounds = array<i64: 2, 16>}, {pipeline_mode = #tpu.pipeline_mode<synchronous>, transform_indices = @transform_1, window_bounds = array<i64: 16, 32>}, {pipeline_mode = #tpu.pipeline_mode<synchronous>, transform_indices = @transform_2, window_bounds = array<i64: 1, 32>}, {pipeline_mode = #tpu.pipeline_mode<synchronous>, transform_indices = @transform_3, window_bounds = array<i64: 32, 9>}, {pipeline_mode = #tpu.pipeline_mode<synchronous>, transform_indices = @transform_4, window_bounds = array<i64: 1, 9>}, {transform_indices = @transform_5, window_bounds = array<i64: 2, 8>}, {transform_indices = @transform_6, window_bounds = array<i64: 2, 1>}]} {
    %c0 = arith.constant 0 : index
    %c0_0 = arith.constant 0 : index
    %0 = vector.load %arg1[%c0, %c0_0] : memref<2x16xbf16, #tpu.memory_space<vmem>>, vector<2x16xbf16>
    %1 = arith.extf %0 : vector<2x16xbf16> to vector<2x16xf32>
    %c0_1 = arith.constant 0 : index
    %c0_2 = arith.constant 0 : index
    %2 = vector.load %arg2[%c0_1, %c0_2] : memref<16x32xf32, #tpu.memory_space<vmem>>, vector<16x32xf32>
    %cst = arith.constant dense<0.000000e+00> : vector<2x32xf32>
    %3 = tpu.matmul %1, %2, %cst {dimension_numbers = #tpu.dot_dimension_numbers<[1], [0], [0], [1], [0, 0, 1, 1], [], []>} : vector<2x16xf32>, vector<16x32xf32>, vector<2x32xf32> -> vector<2x32xf32>
    %c0_3 = arith.constant 0 : index
    %c0_4 = arith.constant 0 : index
    %4 = vector.load %arg3[%c0_3, %c0_4] : memref<1x32xf32, #tpu.memory_space<vmem>>, vector<1x32xf32>
    %5 = vector.broadcast %4 : vector<1x32xf32> to vector<2x32xf32>
    %6 = arith.addf %3, %5 : vector<2x32xf32>
    %cst_5 = arith.constant 0.000000e+00 : f32
    %7 = vector.broadcast %cst_5 : f32 to vector<2x32xf32>
    %8 = arith.maximumf %6, %7 : vector<2x32xf32>
    %c0_6 = arith.constant 0 : index
    %c0_7 = arith.constant 0 : index
    %9 = vector.load %arg4[%c0_6, %c0_7] : memref<32x9xf32, #tpu.memory_space<vmem>>, vector<32x9xf32>
    %cst_8 = arith.constant dense<0.000000e+00> : vector<2x9xf32>
    %10 = tpu.matmul %8, %9, %cst_8 {dimension_numbers = #tpu.dot_dimension_numbers<[1], [0], [0], [1], [0, 0, 1, 1], [], []>} : vector<2x32xf32>, vector<32x9xf32>, vector<2x9xf32> -> vector<2x9xf32>
    %c0_9 = arith.constant 0 : index
    %c0_10 = arith.constant 0 : index
    %11 = vector.load %arg5[%c0_9, %c0_10] : memref<1x9xf32, #tpu.memory_space<vmem>>, vector<1x9xf32>
    %12 = vector.broadcast %11 : vector<1x9xf32> to vector<2x9xf32>
    %13 = arith.addf %10, %12 : vector<2x9xf32>
    %14 = vector.extract_strided_slice %13 {offsets = [0, 8], sizes = [2, 1], strides = [1, 1]} : vector<2x9xf32> to vector<2x1xf32>
    %c0_11 = arith.constant 0 : index
    %c0_12 = arith.constant 0 : index
    %15 = vector.load %arg7[%c0_11, %c0_12] : memref<2x1xf32, #tpu.memory_space<vmem>>, vector<2x1xf32>
    tpu.vector_store %arg7[%c0_11, %c0_12], %14 {strides = array<i32>} : memref<2x1xf32, #tpu.memory_space<vmem>>, vector<2x1xf32>,
    %16 = vector.extract_strided_slice %13 {offsets = [0, 0], sizes = [2, 8], strides = [1, 1]} : vector<2x9xf32> to vector<2x8xf32>
    %cst_13 = arith.constant 0.000000e+00 : f32
    %17 = vector.broadcast %cst_13 : f32 to vector<2x8xf32>
    %18 = arith.maximumf %16, %17 : vector<2x8xf32>
    %cst_14 = arith.constant dense<0xFF800000> : vector<2xf32>
    %19 = vector.multi_reduction <maximumf>, %18, %cst_14 [1] : vector<2x8xf32> to vector<2xf32>
    %20 = vector.shape_cast %19 : vector<2xf32> to vector<2x1xf32>
    %21 = vector.broadcast %20 : vector<2x1xf32> to vector<2x8xf32>
    %22 = arith.subf %18, %21 : vector<2x8xf32>
    %23 = math.exp %22 : vector<2x8xf32>
    %cst_15 = arith.constant dense<0.000000e+00> : vector<2xf32>
    %24 = vector.multi_reduction <add>, %23, %cst_15 [1] : vector<2x8xf32> to vector<2xf32>
    %25 = vector.shape_cast %24 : vector<2xf32> to vector<2x1xf32>
    %26 = vector.broadcast %25 : vector<2x1xf32> to vector<2x8xf32>
    %27 = arith.divf %23, %26 : vector<2x8xf32>
    %c0_16 = arith.constant 0 : index
    %c0_17 = arith.constant 0 : index
    %28 = vector.load %arg6[%c0_16, %c0_17] : memref<2x8xf32, #tpu.memory_space<vmem>>, vector<2x8xf32>
    tpu.vector_store %arg6[%c0_16, %c0_17], %27 {strides = array<i32>} : memref<2x8xf32, #tpu.memory_space<vmem>>, vector<2x8xf32>,
    return
  }
  func.func @transform_0(%arg0: i32) -> (i32, i32) {
    %c0_i32 = arith.constant 0 : i32
    %c0_i32_0 = arith.constant 0 : i32
    return %arg0, %c0_i32 : i32, i32
  }
  func.func @transform_1(%arg0: i32) -> (i32, i32) {
    %c0_i32 = arith.constant 0 : i32
    %c0_i32_0 = arith.constant 0 : i32
    %c0_i32_1 = arith.constant 0 : i32
    return %c0_i32, %c0_i32_0 : i32, i32
  }
  func.func @transform_2(%arg0: i32) -> (i32, i32) {
    %c0_i32 = arith.constant 0 : i32
    %c0_i32_0 = arith.constant 0 : i32
    %c0_i32_1 = arith.constant 0 : i32
    return %c0_i32, %c0_i32_0 : i32, i32
  }
  func.func @transform_3(%arg0: i32) -> (i32, i32) {
    %c0_i32 = arith.constant 0 : i32
    %c0_i32_0 = arith.constant 0 : i32
    %c0_i32_1 = arith.constant 0 : i32
    return %c0_i32, %c0_i32_0 : i32, i32
  }
  func.func @transform_4(%arg0: i32) -> (i32, i32) {
    %c0_i32 = arith.constant 0 : i32
    %c0_i32_0 = arith.constant 0 : i32
    %c0_i32_1 = arith.constant 0 : i32
    return %c0_i32, %c0_i32_0 : i32, i32
  }
  func.func @transform_5(%arg0: i32) -> (i32, i32) {
    %c0_i32 = arith.constant 0 : i32
    %c0_i32_0 = arith.constant 0 : i32
    return %arg0, %c0_i32 : i32, i32
  }
  func.func @transform_6(%arg0: i32) -> (i32, i32) {
    %c0_i32 = arith.constant 0 : i32
    %c0_i32_0 = arith.constant 0 : i32
    return %arg0, %c0_i32 : i32, i32
  }
}

</mosaic_0001>

<llo_original>
// kernel: tpu_custom_call.1
$region0: #{tpu_custom_call.1}
  #allocation0 [shape = 'u32[]', space=smem, size = 0x4, offset = 0x4, fixed_abs, tag = 'smem constant byte address 0x4 - core index']
  #allocation1 [shape = 'u32[72,128]{1,0:T(1,128)}', space=vmem, size = 0x9000, scoped, tag = 'internal scratch']
  %s0 = inlined_call_operand.vmem [shape: bf16[2,16], index: 0, kind: input, shape index: {}]
  %s1 = inlined_call_operand.vmem [shape: f32[16,32], index: 1, kind: input, shape index: {}]
  %s2 = inlined_call_operand.vmem [shape: f32[1,32], index: 2, kind: input, shape index: {}]
  %s3 = inlined_call_operand.vmem [shape: f32[32,9], index: 3, kind: input, shape index: {}]
  %s4 = inlined_call_operand.vmem [shape: f32[1,9], index: 4, kind: input, shape index: {}]
  %s5 = inlined_call_operand.hbm [shape: f32[2,8], index: 5, kind: output, shape index: {0}]
  %s6 = inlined_call_operand.vmem [shape: f32[2,1], index: 6, kind: output, shape index: {1}]
  %7 = xla_tuple %s5, %s6
  %s8 = sld [smem:[#allocation0]]
  $region38: #{tpu_custom_call.1} parent=0
    _
  %s10 = ssub.s32 1, %s8
  %s11 = scalar_select 0, %s10, %s8
  $region1: #{tpu_custom_call.1} parent=0
    #allocation2 [shape = 'u8[1024]{0}', space=vmem, size = 0x400, scoped, tag = 'output window, operand 0, single buffered']
    #allocation3 [shape = 's32[1]{0}', space=sflag, size = 0x4, scoped, tag = 'scoped memory for tpu_custom_call.1']
    %12 = vsyncpa [#allocation3], 0
    // Predicated region
    $region2: #{tpu_custom_call.1} parent=1 // pred_check
      _
    $region3: #{tpu_custom_call.1} parent=1 // pred_check_branch
      %14 = sbr.rel (0) target = $region5
    $region4: #{tpu_custom_call.1} parent=1 // pred_region
      _
    $region5: #{tpu_custom_call.1} parent=1 // pred_fallthru
      _
    // Predicated region
    $region6: #{tpu_custom_call.1} parent=1 // pred_check
      _
    $region7: #{tpu_custom_call.1} parent=1 // pred_check_branch
      %16 = sbr.rel (0) target = $region9
    $region8: #{tpu_custom_call.1} parent=1 // pred_region
      _
    $region9: #{tpu_custom_call.1} parent=1 // pred_fallthru
      _
    // Predicated region
    $region10: #{tpu_custom_call.1} parent=1 // pred_check
      _
    $region11: #{tpu_custom_call.1} parent=1 // pred_check_branch
      %18 = sbr.rel (0) target = $region13
    $region12: #{tpu_custom_call.1} parent=1 // pred_region
      _
    $region13: #{tpu_custom_call.1} parent=1 // pred_fallthru
      _
    // Predicated region
    $region14: #{tpu_custom_call.1} parent=1 // pred_check
      _
    $region15: #{tpu_custom_call.1} parent=1 // pred_check_branch
      %20 = sbr.rel (0) target = $region17
    $region16: #{tpu_custom_call.1} parent=1 // pred_region
      _
    $region17: #{tpu_custom_call.1} parent=1 // pred_fallthru
      _
    // Predicated region
    $region18: #{tpu_custom_call.1} parent=1 // pred_check
      _
    $region19: #{tpu_custom_call.1} parent=1 // pred_check_branch
      %22 = sbr.rel (0) target = $region21
    $region20: #{tpu_custom_call.1} parent=1 // pred_region
      _
    $region21: #{tpu_custom_call.1} parent=1 // pred_fallthru
      _
    %v23 = vld [vmem:[%s0] sm:$0x1]
    %v24 = vunpack.c.l.bf16 %v23
    %v25 = vld [vmem:[%s1] sm:$0xff]
    %v26 = vld [vmem:[%s1 + $0x8] sm:$0xff]
    %v27 = vld [vmem:[%s2] sm:$0x1]
    %v29 = vperm.slane %v27, 0
    %vm31 = vcmask 130048
    %v33 = vsel %vm31, %v24, 0
    %35 = vmatpush.msra.mxu0 0.0
    %36 = vmatpush.msra.mxu0 0.0
    %37 = vmatpush.msra.mxu0 0.0
    %38 = vmatpush.msra.mxu0 0.0
    %39 = vmatpush.msra.mxu0 0.0
    %40 = vmatpush.msra.mxu0 0.0
    %41 = vmatpush.msra.mxu0 0.0
    %42 = vmatpush.msra.mxu0 0.0
    %43 = vmatpush.msra.mxu0 0.0
    %44 = vmatpush.msra.mxu0 0.0
    %45 = vmatpush.msra.mxu0 0.0
    %46 = vmatpush.msra.mxu0 0.0
    %47 = vmatpush.msra.mxu0 0.0
    %48 = vmatpush.msra.mxu0 0.0
    %49 = vmatpush.msra.mxu0 %v26
    %50 = vmatpush.msra.mxu0 %v25
    %51 = vmatmul.f32.gmra.mxu0 %v33
    %v52 = vpop.f32.mrf.mxu0
    %v53 = vadd.f32 %v29, %v52
    %54 = vdwg.mxu0
    %v55 = vmax.f32 %v53, 0.0
    %v56 = vld [vmem:[%s3] sm:$0xff]
    %v57 = vld [vmem:[%s3 + $0x8] sm:$0xff]
    %v58 = vld [vmem:[%s3 + $0x10] sm:$0xff]
    %v59 = vld [vmem:[%s3 + $0x18] sm:$0xff]
    %v60 = vld [vmem:[%s4] sm:$0x1]
    %v62 = vperm.slane %v60, 0
    %vm64 = vcmask 261120
    %v66 = vsel %vm64, %v55, 0
    %68 = vmatpush.msra.mxu0 0.0
    %69 = vmatpush.msra.mxu0 0.0
    %70 = vmatpush.msra.mxu0 0.0
    %71 = vmatpush.msra.mxu0 0.0
    %72 = vmatpush.msra.mxu0 0.0
    %73 = vmatpush.msra.mxu0 0.0
    %74 = vmatpush.msra.mxu0 0.0
    %75 = vmatpush.msra.mxu0 0.0
    %76 = vmatpush.msra.mxu0 0.0
    %77 = vmatpush.msra.mxu0 0.0
    %78 = vmatpush.msra.mxu0 0.0
    %79 = vmatpush.msra.mxu0 0.0
    %80 = vmatpush.msra.mxu0 %v59
    %81 = vmatpush.msra.mxu0 %v58
    %82 = vmatpush.msra.mxu0 %v57
    %83 = vmatpush.msra.mxu0 %v56
    %84 = vmatmul.f32.gmra.mxu0 %v66
    %v85 = vpop.f32.mrf.mxu0
    %v86 = vadd.f32 %v62, %v85
    %87 = vdwg.mxu0
    %89 = vrot.lane.b32.xlu0 %v86, 120
    %v90 = vpop.permute.xlu0 %89
    %vm92 = vcmask 1024
    %93 = vst.msk [vmem:[%s6] sm:$0x3] %vm92, %v90
    %v94 = vmax.f32 %v86, 0.0
    %vm95 = vcmask 58368
    %v96 = vsel %vm95, %v94, -inf
    %97 = vmax.xlane.f32.xlu0 %v96
    %v98 = vpop.xlane.xlu0 %97
    %v99 = vsub.f32 %v94, %v98
    %v100 = vmul.f32 %v99, 1.442695
    %v101 = vpow.pop %v100
    %v102 = vsel %vm95, %v101, 0.0
    %103 = vadd.xlane.f32.xlu0 %v102
    %v104 = vpop.xlane.xlu0 %103
    %v105 = vrcp.pop %v104
    %v106 = vmul.f32 %v104, %v105
    %v107 = vsub.f32 1.0, %v106
    %v108 = vmul.f32 %v105, %v107
    %v109 = vadd.f32 %v105, %v108
    %vm110 = vweird.f32 %v104
    %vm111 = vweird.f32 %v105
    %vm112 = vmor %vm110, %vm111
    %v113 = vsel %vm112, %v105, %v109
    %v114 = vand.u32 2147483647, %v104
    %vm115 = vcmp.eq.f32.partialorder %v114, 8.507059e+37
    %v116 = vand.u32 %v104, 2147483648
    %v117 = vor.u32 1.1754944e-38, %v116
    %v118 = vsel %vm115, %v117, %v113
    %v119 = vmul.f32 %v101, %v118
    %120 = vst.msk [vmem:[#allocation2] sm:$0x3] %vm95, %v119
    // Predicated region
    $region22: #{tpu_custom_call.1} parent=1 // pred_check
      _
    $region23: #{tpu_custom_call.1} parent=1 // pred_check_branch
      %122 = sbr.rel (0) target = $region25
    $region24: #{tpu_custom_call.1} parent=1 // pred_region
      %124 = vsyncadd [#allocation3], 0
      %s126 = sshll.u32 [#allocation2], 4
      %s127 = int_to_ptr.vmem [resolvable:$true] %s126
      %s128 = sshll.u32 %s5, 4
      %s129 = int_to_ptr.hbm [resolvable:$true] %s128
      %131 = dma.vmem_to_hbm [thread:$0]  %s127, 32, %s129, [#allocation3]
    $region25: #{tpu_custom_call.1} parent=1 // pred_fallthru
      _
    // Predicated region
    $region26: #{tpu_custom_call.1} parent=1 // pred_check
      _
    $region27: #{tpu_custom_call.1} parent=1 // pred_check_branch
      %133 = sbr.rel (0) target = $region29
    $region28: #{tpu_custom_call.1} parent=1 // pred_region
      _
    $region29: #{tpu_custom_call.1} parent=1 // pred_fallthru
      _
    // Predicated region
    $region30: #{tpu_custom_call.1} parent=1 // pred_check
      _
    $region31: #{tpu_custom_call.1} parent=1 // pred_check_branch
      %135 = sbr.rel (0) target = $region33
    $region32: #{tpu_custom_call.1} parent=1 // pred_region
      %137 = dma.done [#allocation3], 32
    $region33: #{tpu_custom_call.1} parent=1 // pred_fallthru
      _
    // Predicated region
    $region34: #{tpu_custom_call.1} parent=1 // pred_check
      _
    $region35: #{tpu_custom_call.1} parent=1 // pred_check_branch
      %139 = sbr.rel (0) target = $region37
    $region36: #{tpu_custom_call.1} parent=1 // pred_region
      _
    $region37: #{tpu_custom_call.1} parent=1 // pred_fallthru
      _
    %140 = vsyncpa [#allocation3], 1

</llo_original>
